<compile_context>
chip_gen: v7x
topology: tpu7x:2x2x1
jax: 0.10.0
libtpu: 0.0.40
codegen_flags: <defaults>
</compile_context>

<pallas_src>
import functools

import jax
import jax.numpy as jnp
from jax.experimental import pallas as pl
from jax.experimental.pallas import tpu as pltpu


def attention_head_kernel(x_ref, wpack_ref, o_ref, *, seq_len, matmul_dtype):
    # x_ref:     [TB*S, F]   activations, batch+seq fused (F lane-dense, S in sublanes)
    # wpack_ref: [Fpad+2, H] packed residents: rows [0,F)=W, row -2=b_W, row -1=V
    # o_ref:     [TB, F]     lane-dense output block
    TBxS, F = x_ref.shape
    S = seq_len
    TB = TBxS // S
    rows, H = wpack_ref.shape

    x = x_ref[...]                                            # [TB*S, F] (stored dtype)
    wpack = wpack_ref[...]                                    # [rows, H] tiny, resident
    w = wpack[:F, :]                                          # [F, H]
    bw = wpack[rows - 2:rows - 1, :].astype(jnp.float32)      # [1, H]
    vrow = wpack[rows - 1:rows, :].astype(jnp.float32)        # [1, H]

    # Optional narrow MXU inputs: cast in-kernel (VPU, hidden under slack);
    # elementwise math and accumulation stay f32 on every generation.
    if matmul_dtype is not None:
        x_mm = x.astype(matmul_dtype)
        w = w.astype(matmul_dtype)
    else:
        x_mm = x

    # att = tanh(x @ W + b_W): one fused [TB*S, F] @ [F, H] MXU matmul, f32 acc.
    z = jnp.dot(x_mm, w, preferred_element_type=jnp.float32)  # [TB*S, H]
    att = jnp.tanh(z + bw)                                    # [TB*S, H] (EUP tanh)

    # score = att . V : VPU multiply + lane reduction over H.
    # Result keeps S in sublanes ([TB*S, 1]); no relayout needed downstream.
    score = jnp.sum(att * vrow, axis=-1, keepdims=True)       # [TB*S, 1]
    # (b_V intentionally omitted: softmax over S is shift-invariant.)

    # Softmax over the sequence axis with S in sublanes (XLU sublane max/sum,
    # exp + approx reciprocal on the EUP, one Newton step instead of a divide).
    score3 = score.reshape(TB, S, 1)                          # layout-preserving split
    m = jnp.max(score3, axis=1, keepdims=True)                # [TB, 1, 1]
    e = jnp.exp(score3 - m)                                   # [TB, S, 1]
    denom = jnp.sum(e, axis=1, keepdims=True)                 # [TB, 1, 1], >= 1
    inv = pl.reciprocal(denom, approx=True)
    inv = inv * (2.0 - denom * inv)                           # ~f32 accuracy, no divide
    attn = e * inv                                            # [TB, S, 1], f32

    # context[b, :] = sum_s attn[b, s] * x[b, s, :]
    # VPU broadcast-multiply (weights broadcast across F lanes) + sublane
    # reduction over S.  attn stays f32 -> f32 accumulation even for bf16 x.
    x3 = x.reshape(TB, S, F)                                  # layout-preserving split
    ctx = jnp.sum(attn * x3, axis=1)                          # [TB, F] f32
    o_ref[...] = ctx.astype(o_ref.dtype)


def _vmem_budget_bytes():
    """Conservative per-step double-buffer budget, re-derived per generation
    (v5e/v6e: 128 MiB physical, v7x: 64 MiB)."""
    try:
        cap = pltpu.get_tpu_info().vmem_capacity_bytes
    except Exception:
        cap = 64 << 20                     # v7x per-TensorCore floor
    return max(cap // 4, 16 << 20)


def _choose_batch_tile(B, S, F, in_itemsize, out_itemsize, vmem_budget_bytes):
    """Batch rows per grid step.

    * TB divides B; TB (and TB*S) are multiples of 8 whenever TB < B
      (BlockSpec (8,128) rule; full-extent blocks are exempt).
    * Target ~1024 fused rows per step: with K=F and N=H tiny the MXU is
      never binding, so the only lever is amortizing the ~0.35 us / ~600-cycle
      per-step pipeline overhead.
    * Double-buffered input + output blocks must fit the VMEM budget
      (matters on v7x's 64 MiB VMEM for large B).
    * Prefer an even number of grid steps (>= 2) so both v7x TensorCores get
      work under dimension_semantics=("parallel",).
    """
    def step_bytes(tb):
        return 2 * tb * S * F * in_itemsize + 2 * tb * F * out_itemsize

    target_rows = 1024
    if B * S <= target_rows and step_bytes(B) <= vmem_budget_bytes:
        return B                            # whole batch, single fat step

    tb_cap = max(8, min((target_rows // max(S, 1)) // 8 * 8, (B // 8) * 8))
    while tb_cap > 8 and step_bytes(tb_cap) > vmem_budget_bytes:
        tb_cap -= 8

    best = None
    for tb in range(tb_cap, 7, -8):
        if B % tb == 0 and step_bytes(tb) <= vmem_budget_bytes:
            if best is None:
                best = tb
            if (B // tb) % 2 == 0:          # even grid -> both v7x cores busy
                return tb
    if best is not None:
        return best
    # TODO(synk): B with no multiple-of-8 divisor below the cap falls back to
    # one whole-batch block; the wrapper raises vmem_limit_bytes to cover it.
    return B


def attention_head(features, W, b_W, V, b_V=None, *, matmul_dtype=None):
    """Pallas forward of AttentionHead.

    features: [B, S, F]; W: [F, H]; b_W: [H]; V: [H, 1]; b_V: [1] (ignored:
    softmax over the sequence axis is shift-invariant, so the scalar V bias
    cannot change the output).  Returns [B, F].

    matmul_dtype: optionally jnp.bfloat16 (valid on v5e/v6e/v7x: the MXU
    takes bf16 inputs with f32 accumulation on all generations).  The cast
    happens inside the kernel; activations are DMAed in their stored dtype.
    """
    del b_V                                 # shift-invariant under softmax
    B, S, F = features.shape
    Fw, H = W.shape
    assert Fw == F
    out_dtype = features.dtype
    in_itemsize = features.dtype.itemsize

    # Pack all resident weights into ONE array (single DMA / single BlockSpec):
    #   rows [0, F)      : W
    #   rows [F, Fpad)   : zero padding to a sublane (8-row) boundary
    #   row  Fpad        : b_W   (lane row)
    #   row  Fpad + 1    : V     (lane row)
    pad = (-F) % 8
    wdt = W.dtype
    pack = jnp.concatenate(
        [
            jnp.asarray(W, dtype=wdt),
            jnp.zeros((pad, H), dtype=wdt),
            jnp.asarray(b_W, dtype=wdt).reshape(1, H),
            jnp.asarray(V, dtype=wdt).reshape(1, H),
        ],
        axis=0,
    )                                        # [Fpad + 2, H]
    pack_rows = F + pad + 2

    # Flatten batch+seq in HBM (free metadata reshape) -> 2-D activation blocks.
    x2 = features.reshape(B * S, F)

    budget = _vmem_budget_bytes()
    TB = _choose_batch_tile(B, S, F, in_itemsize, in_itemsize, budget)
    grid = (B // TB,)

    step_bytes = (2 * TB * S * F * in_itemsize
                  + 2 * TB * F * in_itemsize
                  + 2 * pack_rows * H * pack.dtype.itemsize)
    vmem_limit = None
    if step_bytes > (16 << 20):              # big whole-batch fallback: raise the cap
        vmem_limit = int(min(max(2 * step_bytes, 32 << 20), 96 << 20))

    kernel = functools.partial(attention_head_kernel, seq_len=S,
                               matmul_dtype=matmul_dtype)

    return pl.pallas_call(
        kernel,
        out_shape=jax.ShapeDtypeStruct((B, F), out_dtype),
        grid_spec=pltpu.PrefetchScalarGridSpec(
            num_scalar_prefetch=0,
            grid=grid,
            in_specs=[
                pl.BlockSpec((TB * S, F), lambda b: (b, 0)),        # activations
                pl.BlockSpec((pack_rows, H), lambda b: (0, 0)),     # packed residents
            ],
            out_specs=pl.BlockSpec((TB, F), lambda b: (b, 0)),      # lane-dense output
        ),
        compiler_params=pltpu.CompilerParams(
            dimension_semantics=("parallel",),
            vmem_limit_bytes=vmem_limit,
        ),
    )(x2, pack)


def attention_head_ref(features, W, b_W, V, b_V):
    att = jnp.tanh(features @ W + b_W)             # [B, S, H]
    score = att @ V + b_V                          # [B, S, 1]
    weights = jax.nn.softmax(score, axis=1)        # softmax over seq
    return jnp.sum(weights * features, axis=1)     # [B, F]


if __name__ == "__main__":
    # Small shapes implied by the module: batch=2, seq=8, in_features=32, hidden=16
    B, S, F, H = 2, 8, 32, 16

    key = jax.random.PRNGKey(0)
    k_x, k_w, k_bw, k_v, k_bv = jax.random.split(key, 5)

    features = jax.random.normal(k_x, (B, S, F), dtype=jnp.float32)
    W = jax.random.normal(k_w, (F, H), dtype=jnp.float32) * 0.1
    b_W = jax.random.normal(k_bw, (H,), dtype=jnp.float32) * 0.1
    V = jax.random.normal(k_v, (H, 1), dtype=jnp.float32) * 0.1
    b_V = jax.random.normal(k_bv, (1,), dtype=jnp.float32) * 0.1

    out = attention_head(features, W, b_W, V, b_V)
    out = jax.block_until_ready(out)

    ref = attention_head_ref(features, W, b_W, V, b_V)
    assert out.shape == (B, F)
    assert jnp.allclose(out, ref, atol=1e-4, rtol=1e-4), float(
        jnp.max(jnp.abs(out - ref))
    )

    print("KERNEL_OK")
</pallas_src>

<mosaic_0001>
module attributes {stable_mosaic.version = 11 : i64} {
  func.func @attention_head_kernel(%arg0: i32, %arg1: memref<16x32xf32, #tpu.memory_space<vmem>>, %arg2: memref<34x16xf32, #tpu.memory_space<vmem>>, %arg3: memref<2x32xf32, #tpu.memory_space<vmem>>) attributes {dimension_semantics = [#tpu.dimension_semantics<parallel>], iteration_bounds = array<i64: 1>, scalar_prefetch = 0 : i64, scratch_operands = 0 : i64, tpu.core_type = #tpu.core_type<tc>, window_params = [{transform_indices = @transform_0, window_bounds = array<i64: 16, 32>}, {pipeline_mode = #tpu.pipeline_mode<synchronous>, transform_indices = @transform_1, window_bounds = array<i64: 34, 16>}, {transform_indices = @transform_2, window_bounds = array<i64: 2, 32>}]} {
    %c0 = arith.constant 0 : index
    %c0_0 = arith.constant 0 : index
    %0 = vector.load %arg1[%c0, %c0_0] : memref<16x32xf32, #tpu.memory_space<vmem>>, vector<16x32xf32>
    %c0_1 = arith.constant 0 : index
    %c0_2 = arith.constant 0 : index
    %1 = vector.load %arg2[%c0_1, %c0_2] : memref<34x16xf32, #tpu.memory_space<vmem>>, vector<34x16xf32>
    %2 = vector.extract_strided_slice %1 {offsets = [0, 0], sizes = [32, 16], strides = [1, 1]} : vector<34x16xf32> to vector<32x16xf32>
    %3 = vector.extract_strided_slice %1 {offsets = [32, 0], sizes = [1, 16], strides = [1, 1]} : vector<34x16xf32> to vector<1x16xf32>
    %4 = vector.extract_strided_slice %1 {offsets = [33, 0], sizes = [1, 16], strides = [1, 1]} : vector<34x16xf32> to vector<1x16xf32>
    %cst = arith.constant dense<0.000000e+00> : vector<16x16xf32>
    %5 = tpu.matmul %0, %2, %cst {dimension_numbers = #tpu.dot_dimension_numbers<[1], [0], [0], [1], [0, 0, 1, 1], [], []>} : vector<16x32xf32>, vector<32x16xf32>, vector<16x16xf32> -> vector<16x16xf32>
    %6 = vector.broadcast %3 : vector<1x16xf32> to vector<16x16xf32>
    %7 = arith.addf %5, %6 : vector<16x16xf32>
    %8 = math.tanh %7 : vector<16x16xf32>
    %9 = vector.broadcast %4 : vector<1x16xf32> to vector<16x16xf32>
    %10 = arith.mulf %8, %9 : vector<16x16xf32>
    %cst_3 = arith.constant dense<0.000000e+00> : vector<16xf32>
    %11 = vector.multi_reduction <add>, %10, %cst_3 [1] : vector<16x16xf32> to vector<16xf32>
    %12 = vector.shape_cast %11 : vector<16xf32> to vector<16x1xf32>
    %13 = vector.shape_cast %12 : vector<16x1xf32> to vector<2x8x1xf32>
    %cst_4 = arith.constant dense<0xFF800000> : vector<2x1xf32>
    %14 = vector.multi_reduction <maximumf>, %13, %cst_4 [1] : vector<2x8x1xf32> to vector<2x1xf32>
    %15 = vector.shape_cast %14 : vector<2x1xf32> to vector<2x1x1xf32>
    %16 = vector.broadcast %15 : vector<2x1x1xf32> to vector<2x8x1xf32>
    %17 = arith.subf %13, %16 : vector<2x8x1xf32>
    %18 = math.exp %17 : vector<2x8x1xf32>
    %cst_5 = arith.constant dense<0.000000e+00> : vector<2x1xf32>
    %19 = vector.multi_reduction <add>, %18, %cst_5 [1] : vector<2x8x1xf32> to vector<2x1xf32>
    %20 = vector.shape_cast %19 : vector<2x1xf32> to vector<2x1x1xf32>
    %21 = tpu.reciprocal %20 {approx = true} : vector<2x1x1xf32> -> vector<2x1x1xf32>
    %22 = arith.mulf %20, %21 : vector<2x1x1xf32>
    %cst_6 = arith.constant 2.000000e+00 : f32
    %23 = vector.broadcast %cst_6 : f32 to vector<2x1x1xf32>
    %24 = arith.subf %23, %22 : vector<2x1x1xf32>
    %25 = arith.mulf %21, %24 : vector<2x1x1xf32>
    %26 = vector.broadcast %25 : vector<2x1x1xf32> to vector<2x8x1xf32>
    %27 = arith.mulf %18, %26 : vector<2x8x1xf32>
    %28 = vector.shape_cast %0 : vector<16x32xf32> to vector<2x8x32xf32>
    %29 = vector.broadcast %27 : vector<2x8x1xf32> to vector<2x8x32xf32>
    %30 = arith.mulf %29, %28 : vector<2x8x32xf32>
    %cst_7 = arith.constant dense<0.000000e+00> : vector<2x32xf32>
    %31 = vector.multi_reduction <add>, %30, %cst_7 [1] : vector<2x8x32xf32> to vector<2x32xf32>
    %c0_8 = arith.constant 0 : index
    %c0_9 = arith.constant 0 : index
    %32 = vector.load %arg3[%c0_8, %c0_9] : memref<2x32xf32, #tpu.memory_space<vmem>>, vector<2x32xf32>
    tpu.vector_store %arg3[%c0_8, %c0_9], %31 {strides = array<i32>} : memref<2x32xf32, #tpu.memory_space<vmem>>, vector<2x32xf32>,
    return
  }
  func.func @transform_0(%arg0: i32) -> (i32, i32) {
    %c0_i32 = arith.constant 0 : i32
    %c0_i32_0 = arith.constant 0 : i32
    return %arg0, %c0_i32 : i32, i32
  }
  func.func @transform_1(%arg0: i32) -> (i32, i32) {
    %c0_i32 = arith.constant 0 : i32
    %c0_i32_0 = arith.constant 0 : i32
    %c0_i32_1 = arith.constant 0 : i32
    return %c0_i32, %c0_i32_0 : i32, i32
  }
  func.func @transform_2(%arg0: i32) -> (i32, i32) {
    %c0_i32 = arith.constant 0 : i32
    %c0_i32_0 = arith.constant 0 : i32
    return %arg0, %c0_i32 : i32, i32
  }
}

</mosaic_0001>

<llo_original>
// kernel: tpu_custom_call.1
$region0: #{tpu_custom_call.1}
  #allocation0 [shape = 'u32[]', space=smem, size = 0x4, offset = 0x4, fixed_abs, tag = 'smem constant byte address 0x4 - core index']
  #allocation1 [shape = 'u32[144,128]{1,0:T(1,128)}', space=vmem, size = 0x12000, scoped, tag = 'internal scratch']
  %s0 = inlined_call_operand.vmem [shape: f32[16,32], index: 0, kind: input, shape index: {}]
  %s1 = inlined_call_operand.vmem [shape: f32[34,16], index: 1, kind: input, shape index: {}]
  %s2 = inlined_call_operand.hbm [shape: f32[2,32], index: 2, kind: output, shape index: {}]
  %s3 = sld [smem:[#allocation0]]
  $region18: #{tpu_custom_call.1} parent=0
    _
  %s5 = ssub.s32 1, %s3
  %s6 = scalar_select 0, %s5, %s3
  $region1: #{tpu_custom_call.1} parent=0
    #allocation2 [shape = 'u8[1024]{0}', space=vmem, size = 0x400, scoped, tag = 'output window, operand 0, single buffered']
    #allocation3 [shape = 's32[1]{0}', space=sflag, size = 0x4, scoped, tag = 'scoped memory for tpu_custom_call.1']
    %7 = vsyncpa [#allocation3], 0
    // Predicated region
    $region2: #{tpu_custom_call.1} parent=1 // pred_check
      _
    $region3: #{tpu_custom_call.1} parent=1 // pred_check_branch
      %9 = sbr.rel (0) target = $region5
    $region4: #{tpu_custom_call.1} parent=1 // pred_region
      _
    $region5: #{tpu_custom_call.1} parent=1 // pred_fallthru
      _
    // Predicated region
    $region6: #{tpu_custom_call.1} parent=1 // pred_check
      _
    $region7: #{tpu_custom_call.1} parent=1 // pred_check_branch
      %11 = sbr.rel (0) target = $region9
    $region8: #{tpu_custom_call.1} parent=1 // pred_region
      _
    $region9: #{tpu_custom_call.1} parent=1 // pred_fallthru
      _
    %v12 = vld [vmem:[%s0] sm:$0xff]
    %v13 = vld [vmem:[%s0 + $0x8] sm:$0xff]
    %v14 = vld [vmem:[%s1] sm:$0xff]
    %v15 = vld [vmem:[%s1 + $0x8] sm:$0xff]
    %v16 = vld [vmem:[%s1 + $0x10] sm:$0xff]
    %v17 = vld [vmem:[%s1 + $0x18] sm:$0xff]
    %v18 = vld [vmem:[%s1 + $0x20] sm:$0x3]
    %v19 = vlaneseq
    %v20 = vshrl.u32 %v19, 7
    %v21 = vsub.s32 0, %v20
    %v22 = vrot.slane %v18, %v21
    %vm23 = vcmask 261120
    %v25 = vsel %vm23, %v12, 0
    %v28 = vsel %vm23, %v13, 0
    %30 = vmatprep.subr.mxu0 0.0
    %31 = vmatpush1.msra.mxu0 %v14
    %32 = vmatprep.subr.mxu0 0.0
    %33 = vmatpush1.msra.mxu0 %v15
    %34 = vmatprep.subr.mxu0 0.0
    %35 = vmatpush1.msra.mxu0 %v16
    %36 = vmatprep.subr.mxu0 0.0
    %37 = vmatpush1.msra.mxu0 %v17
    %38 = vmatprep.subr.mxu0 0.0
    %39 = vmatpush1.msra.mxu0 0.0
    %40 = vmatprep.subr.mxu0 0.0
    %41 = vmatpush1.msra.mxu0 0.0
    %42 = vmatprep.subr.mxu0 0.0
    %43 = vmatpush1.msra.mxu0 0.0
    %44 = vmatprep.subr.mxu0 0.0
    %45 = vmatpush1.msra.mxu0 0.0
    %46 = vmatprep.subr.mxu0 0.0
    %47 = vmatpush1.msra.mxu0 0.0
    %48 = vmatprep.subr.mxu0 0.0
    %49 = vmatpush1.msra.mxu0 0.0
    %50 = vmatprep.subr.mxu0 0.0
    %51 = vmatpush1.msra.mxu0 0.0
    %52 = vmatprep.subr.mxu0 0.0
    %53 = vmatpush1.msra.mxu0 0.0
    %54 = vmatprep.subr.mxu0 0.0
    %55 = vmatpush1.msra.mxu0 0.0
    %56 = vmatprep.subr.mxu0 0.0
    %57 = vmatpush1.msra.mxu0 0.0
    %58 = vmatprep.subr.mxu0 0.0
    %59 = vmatpush1.msra.mxu0 0.0
    %60 = vmatprep.subr.mxu0 0.0
    %61 = vmatpush1.msra.mxu0 0.0
    %62 = vmatprep.subr.mxu0 0.0
    %63 = vmatpush1.msra.mxu0 0.0
    %64 = vmatprep.subr.mxu0 0.0
    %65 = vmatpush1.msra.mxu0 0.0
    %66 = vmatprep.subr.mxu0 0.0
    %67 = vmatpush1.msra.mxu0 0.0
    %68 = vmatprep.subr.mxu0 0.0
    %69 = vmatpush1.msra.mxu0 0.0
    %70 = vmatprep.subr.mxu0 0.0
    %71 = vmatpush1.msra.mxu0 0.0
    %72 = vmatprep.subr.mxu0 0.0
    %73 = vmatpush1.msra.mxu0 0.0
    %74 = vmatprep.subr.mxu0 0.0
    %75 = vmatpush1.msra.mxu0 0.0
    %76 = vmatprep.subr.mxu0 0.0
    %77 = vmatpush1.msra.mxu0 0.0
    %78 = vmatprep.subr.mxu0 0.0
    %79 = vmatpush1.msra.mxu0 0.0
    %80 = vmatprep.subr.mxu0 0.0
    %81 = vmatpush1.msra.mxu0 0.0
    %82 = vmatprep.subr.mxu0 0.0
    %83 = vmatpush1.msra.mxu0 0.0
    %84 = vmatprep.subr.mxu0 0.0
    %85 = vmatpush1.msra.mxu0 0.0
    %86 = vmatprep.subr.mxu0 0.0
    %87 = vmatpush1.msra.mxu0 0.0
    %88 = vmatprep.subr.mxu0 0.0
    %89 = vmatpush1.msra.mxu0 0.0
    %90 = vmatprep.subr.mxu0 0.0
    %91 = vmatpush1.msra.mxu0 0.0
    %92 = vmatprep.subr.mxu0 0.0
    %93 = vmatpush1.msra.mxu0 0.0
    %94 = vmatprep.mubr.f32.mxu0 0.0
    %95 = vmatmul.mubr.f32.gmra.mrb[0].mxu0 %v25
    %v96 = vpop.f32.mrb[0].mxu0
    %v97 = vadd.f32 %v22, %v96
    %v98 = vpop.f32.mrb[0].mxu0
    %99 = vmatprep.mubr.f32.mxu0 0.0
    %100 = vmatmul.mubr.f32.gmra.mrb[0].mxu0 %v28
    %v101 = vpop.f32.mrb[0].mxu0
    %v102 = vadd.f32 %v22, %v101
    %v103 = vpop.f32.mrb[0].mxu0
    %104 = vdwg.mxu0
    %v105 = vtanh.pop %v97
    %v106 = vtanh.pop %v102
    %v107 = vlaneseq
    %v108 = vshrl.u32 %v107, 7
    %v109 = vsub.s32 1, %v108
    %v110 = vrot.slane %v18, %v109
    %v111 = vmul.f32 %v105, %v110
    %v112 = vmul.f32 %v106, %v110
    %vm113 = vcmask 130048
    %v114 = vsel %vm113, %v111, 0.0
    %115 = vadd.xlane.f32.xlu0 %v114
    %v116 = vpop.xlane.xlu0 %115
    %v117 = vsel %vm113, %v112, 0.0
    %118 = vadd.xlane.f32.xlu0 %v117
    %v119 = vpop.xlane.xlu0 %118
    %v120 = vrot.slane %v116, 4
    %v121 = vmax.f32 %v116, %v120
    %v122 = vrot.slane %v121, 2
    %v123 = vmax.f32 %v121, %v122
    %v124 = vrot.slane %v123, 1
    %v125 = vmax.f32 %v123, %v124
    %v126 = vrot.slane %v119, 4
    %v127 = vmax.f32 %v119, %v126
    %v128 = vrot.slane %v127, 2
    %v129 = vmax.f32 %v127, %v128
    %v130 = vrot.slane %v129, 1
    %v131 = vmax.f32 %v129, %v130
    %v132 = vsub.f32 %v116, %v125
    %v133 = vsub.f32 %v119, %v131
    %v134 = vmul.f32 %v132, 1.442695
    %v135 = vpow.pop %v134
    %v136 = vmul.f32 %v133, 1.442695
    %v137 = vpow.pop %v136
    %v138 = vrot.slane %v135, 4
    %v139 = vadd.f32 %v135, %v138
    %v140 = vrot.slane %v139, 2
    %v141 = vadd.f32 %v139, %v140
    %v142 = vrot.slane %v141, 1
    %v143 = vadd.f32 %v141, %v142
    %v144 = vrot.slane %v137, 4
    %v145 = vadd.f32 %v137, %v144
    %v146 = vrot.slane %v145, 2
    %v147 = vadd.f32 %v145, %v146
    %v148 = vrot.slane %v147, 1
    %v149 = vadd.f32 %v147, %v148
    %v150 = vrcp.pop %v143
    %v151 = vrcp.pop %v149
    %v152 = vmul.f32 %v143, %v150
    %v153 = vmul.f32 %v149, %v151
    %v154 = vsub.f32 2.0, %v152
    %v155 = vsub.f32 2.0, %v153
    %v156 = vmul.f32 %v150, %v154
    %v157 = vmul.f32 %v151, %v155
    %v158 = vmul.f32 %v135, %v156
    %v159 = vmul.f32 %v137, %v157
    %v160 = vmul.f32 %v158, %v12
    %v161 = vmul.f32 %v159, %v13
    %v162 = vsel %vm23, %v160, 0.0
    %v163 = vrot.slane %v162, 4
    %v164 = vadd.f32 %v162, %v163
    %v165 = vrot.slane %v164, 2
    %v166 = vadd.f32 %v164, %v165
    %v167 = vrot.slane %v166, 1
    %v168 = vadd.f32 %v166, %v167
    %v169 = vsel %vm23, %v161, 0.0
    %v170 = vrot.slane %v169, 4
    %v171 = vadd.f32 %v169, %v170
    %v172 = vrot.slane %v171, 2
    %v173 = vadd.f32 %v171, %v172
    %v174 = vrot.slane %v173, 1
    %v175 = vadd.f32 %v173, %v174
    %vm178 = vcmask 1041409
    %v179 = vsel %vm178, %v175, %v168
    %vm181 = vcmask 254976
    %182 = vst.msk [vmem:[#allocation2] sm:$0x3] %vm181, %v179
    // Predicated region
    $region10: #{tpu_custom_call.1} parent=1 // pred_check
      _
    $region11: #{tpu_custom_call.1} parent=1 // pred_check_branch
      %184 = sbr.rel (0) target = $region13
    $region12: #{tpu_custom_call.1} parent=1 // pred_region
      %s186 = ssub.s32 32, 32
      %187 = vsyncadd [#allocation3], %s186
      %s189 = sshll.u32 [#allocation2], 4
      %s190 = int_to_ptr.vmem [resolvable:$true] %s189
      %192 = dma.vmem_to_hbm [thread:$0]  %s190, 32, %s2, [#allocation3]
    $region13: #{tpu_custom_call.1} parent=1 // pred_fallthru
      _
    // Predicated region
    $region14: #{tpu_custom_call.1} parent=1 // pred_check
      _
    $region15: #{tpu_custom_call.1} parent=1 // pred_check_branch
      %194 = sbr.rel (0) target = $region17
    $region16: #{tpu_custom_call.1} parent=1 // pred_region
      %195 = dma.done [#allocation3], 32
    $region17: #{tpu_custom_call.1} parent=1 // pred_fallthru
      _
    %196 = vsyncpa [#allocation3], 1

</llo_original>
